<compile_context>
chip_gen: v5e
topology: v5e:2x2
jax: 0.10.0
libtpu: 0.0.40
codegen_flags: <defaults>
</compile_context>

<pallas_src>
import functools

import jax
import jax.numpy as jnp
from jax.experimental import pallas as pl
from jax.experimental.pallas import tpu as pltpu

INPUT_SIZE = 28
HIDDEN = 64
NUM_CLASSES = 10


def lstm_kernel(x_ref, wih_ref, whh_ref, b_ref, wout_ref, bout_ref,
                out_ref, gx_ref, *, seq_len, batch, hidden):
    """Whole LSTM forward + final Linear in one kernel invocation.

    x_ref    : (T*B, I)  bf16  time-major flattened inputs (batch padded to B)
    wih_ref  : (I, 4H)   bf16  W_ih^T, gate blocks reordered to [i, f, o, g]
    whh_ref  : (H, 4H)   bf16  W_hh^T, gate blocks reordered to [i, f, o, g]
    b_ref    : (1, 4H)   f32   b_ih + b_hh, reordered to [i, f, o, g]
    wout_ref : (H, Cp)   f32   W_out^T zero-padded to Cp=128 lanes
    bout_ref : (1, Cp)   f32   b_out zero-padded to Cp lanes
    out_ref  : (B, Cp)   f32   padded logits (lane-dense unmasked store)
    gx_ref   : (T*B, 4H) f32   VMEM scratch for the hoisted input projection
    """
    T, B, H = seq_len, batch, hidden

    # Input projection for ALL timesteps in one MXU matmul (bf16 operands,
    # f32 accumulate); result lives in VMEM scratch instead of pinning
    # 16 vregs across the unrolled recurrence.
    gx_ref[...] = (jnp.dot(x_ref[...], wih_ref[...],
                           preferred_element_type=jnp.float32)
                   + b_ref[...])                                   # (T*B, 4H)

    h = jnp.zeros((B, H), jnp.float32)
    c = jnp.zeros((B, H), jnp.float32)

    # Fully unrolled recurrence (T is small & static).  Only the unavoidable
    # h @ W_hh^T dependency sits on the serial chain.
    # TODO(synk): if a bundle dump shows a W_hh RHS push per step, switch the
    # recurrent dot to the weight-stationary pltpu.matmul_push_rhs /
    # matmul_acc_lhs / matmul_pop pattern (2x 128-lane halves on v5e).
    for t in range(T):
        gates = (gx_ref[t * B:(t + 1) * B, :]
                 + jnp.dot(h.astype(jnp.bfloat16), whh_ref[...],
                           preferred_element_type=jnp.float32))    # (B, 4H)

        # Gate order [i, f, o, g]: sigmoid on 3H lanes, tanh on H lanes only.
        sig = jax.nn.sigmoid(gates[:, :3 * H])
        g_g = jnp.tanh(gates[:, 3 * H:])
        i_g = sig[:, 0 * H:1 * H]
        f_g = sig[:, 1 * H:2 * H]
        o_g = sig[:, 2 * H:3 * H]

        c = f_g * c + i_g * g_g
        h = o_g * jnp.tanh(c)

    # Final Linear once on the last hidden state (f32, lane-dense store).
    out_ref[...] = (jnp.dot(h, wout_ref[...],
                            preferred_element_type=jnp.float32)
                    + bout_ref[...])


def _reorder_gates(w):
    """Reorder PyTorch gate blocks [i, f, g, o] -> [i, f, o, g] along axis 0."""
    H4 = w.shape[0]
    H = H4 // 4
    blocks = w.reshape((4, H) + w.shape[1:])
    return blocks[jnp.array([0, 1, 3, 2])].reshape(w.shape)


def prepare_params(w_ih, w_hh, b_ih, b_hh, w_out, b_out):
    """One-time weight layout plumbing (cache the result across calls)."""
    H = w_hh.shape[1]
    C = w_out.shape[0]
    C_pad = ((C + 127) // 128) * 128      # lane-dense classifier output

    wih_t = jnp.transpose(_reorder_gates(w_ih)).astype(jnp.bfloat16)   # (I, 4H)
    whh_t = jnp.transpose(_reorder_gates(w_hh)).astype(jnp.bfloat16)   # (H, 4H)
    bias = _reorder_gates((b_ih + b_hh).astype(jnp.float32)
                          ).reshape(1, 4 * H)                          # (1, 4H)
    wout_t = jnp.zeros((H, C_pad), jnp.float32).at[:, :C].set(
        jnp.transpose(w_out).astype(jnp.float32))                      # (H, Cp)
    bout_p = jnp.zeros((1, C_pad), jnp.float32).at[:, :C].set(
        b_out.astype(jnp.float32))                                     # (1, Cp)
    return wih_t, whh_t, bias, wout_t, bout_p


@jax.jit
def rnn_forward(x, wih_t, whh_t, bias, wout_t, bout_p):
    """x: (B, T, I) float32 -> logits (B, NUM_CLASSES) float32."""
    B, T, I = x.shape
    H = whh_t.shape[0]
    C_pad = wout_t.shape[1]

    B_pad = ((B + 7) // 8) * 8            # sublane-dense batch

    # Per-call layout plumbing for x only: pad batch, go time-major, flatten
    # so the kernel sees one (T*B_pad, I) slab (row block t == timestep t).
    x_p = jnp.pad(x.astype(jnp.bfloat16), ((0, B_pad - B), (0, 0), (0, 0)))
    x2d = jnp.transpose(x_p, (1, 0, 2)).reshape(T * B_pad, I)

    kernel = functools.partial(lstm_kernel, seq_len=T, batch=B_pad, hidden=H)

    # Gridless, fully VMEM-resident design.  Footprint here is ~100 KB; if
    # reused at large B/T, add a batch-tile grid axis ("parallel") and budget
    # gates_x against v7x's 64 MiB physical / 32 MiB scoped-default VMEM.
    vmem = pl.BlockSpec(memory_space=pltpu.MemorySpace.VMEM)
    out_pad = pl.pallas_call(
        kernel,
        out_shape=jax.ShapeDtypeStruct((B_pad, C_pad), jnp.float32),
        in_specs=[vmem] * 6,
        out_specs=vmem,
        scratch_shapes=[pltpu.VMEM((T * B_pad, 4 * H), jnp.float32)],
    )(x2d, wih_t, whh_t, bias, wout_t, bout_p)

    return out_pad[:B, :NUM_CLASSES]


def rnn_forward_reference(x, w_ih, w_hh, b_ih, b_hh, w_out, b_out):
    """Pure-JAX f32 reference (lax.scan) matching PyTorch LSTM semantics."""
    B, T, I = x.shape
    H = w_hh.shape[1]

    def step(carry, x_t):
        h, c = carry
        gates = x_t @ w_ih.T + b_ih + h @ w_hh.T + b_hh
        i_g = jax.nn.sigmoid(gates[:, 0 * H:1 * H])   # PyTorch order: i,f,g,o
        f_g = jax.nn.sigmoid(gates[:, 1 * H:2 * H])
        g_g = jnp.tanh(gates[:, 2 * H:3 * H])
        o_g = jax.nn.sigmoid(gates[:, 3 * H:4 * H])
        c_new = f_g * c + i_g * g_g
        h_new = o_g * jnp.tanh(c_new)
        return (h_new, c_new), None

    h0 = jnp.zeros((B, H), jnp.float32)
    c0 = jnp.zeros((B, H), jnp.float32)
    (h_T, _), _ = jax.lax.scan(step, (h0, c0), jnp.transpose(x, (1, 0, 2)))
    return h_T @ w_out.T + b_out


if __name__ == "__main__":
    key = jax.random.PRNGKey(0)
    B, T, I, H, C = 2, 8, INPUT_SIZE, HIDDEN, NUM_CLASSES

    k = jax.random.split(key, 8)
    # Deterministic PyTorch-style init: U(-1/sqrt(H), 1/sqrt(H)).
    bound = 1.0 / jnp.sqrt(jnp.float32(H))
    w_ih = jax.random.uniform(k[0], (4 * H, I), jnp.float32, -bound, bound)
    w_hh = jax.random.uniform(k[1], (4 * H, H), jnp.float32, -bound, bound)
    b_ih = jax.random.uniform(k[2], (4 * H,), jnp.float32, -bound, bound)
    b_hh = jax.random.uniform(k[3], (4 * H,), jnp.float32, -bound, bound)
    w_out = jax.random.uniform(k[4], (C, H), jnp.float32, -bound, bound)
    b_out = jax.random.uniform(k[5], (C,), jnp.float32, -bound, bound)

    x = jax.random.normal(k[6], (B, T, I), jnp.float32)

    # One-time weight prep (cached across calls in real use).
    params = prepare_params(w_ih, w_hh, b_ih, b_hh, w_out, b_out)
    params = jax.block_until_ready(params)

    out = rnn_forward(x, *params)
    out = jax.block_until_ready(out)

    ref = rnn_forward_reference(x, w_ih, w_hh, b_ih, b_hh, w_out, b_out)
    assert out.shape == (B, C)
    # Tolerance accounts for bf16 MXU operands (f32 accumulation / elementwise).
    assert jnp.allclose(out, ref, rtol=2e-2, atol=2e-2), "mismatch vs reference"

    print("KERNEL_OK")
</pallas_src>

<mosaic_0001>
module attributes {stable_mosaic.version = 11 : i64} {
  func.func @lstm_kernel(%arg0: memref<64x28xbf16, #tpu.memory_space<vmem>>, %arg1: memref<28x256xbf16, #tpu.memory_space<vmem>>, %arg2: memref<64x256xbf16, #tpu.memory_space<vmem>>, %arg3: memref<1x256xf32, #tpu.memory_space<vmem>>, %arg4: memref<64x128xf32, #tpu.memory_space<vmem>>, %arg5: memref<1x128xf32, #tpu.memory_space<vmem>>, %arg6: memref<8x128xf32, #tpu.memory_space<vmem>>, %arg7: memref<64x256xf32, #tpu.memory_space<vmem>>) attributes {dimension_semantics = [], scalar_prefetch = 0 : i64, scratch_operands = 1 : i64, tpu.core_type = #tpu.core_type<tc>} {
    %c0 = arith.constant 0 : index
    %c0_0 = arith.constant 0 : index
    %0 = vector.load %arg0[%c0, %c0_0] : memref<64x28xbf16, #tpu.memory_space<vmem>>, vector<64x28xbf16>
    %c0_1 = arith.constant 0 : index
    %c0_2 = arith.constant 0 : index
    %1 = vector.load %arg1[%c0_1, %c0_2] : memref<28x256xbf16, #tpu.memory_space<vmem>>, vector<28x256xbf16>
    %cst = arith.constant dense<0.000000e+00> : vector<64x256xf32>
    %2 = tpu.matmul %0, %1, %cst {dimension_numbers = #tpu.dot_dimension_numbers<[1], [0], [0], [1], [0, 0, 1, 1], [], []>} : vector<64x28xbf16>, vector<28x256xbf16>, vector<64x256xf32> -> vector<64x256xf32>
    %c0_3 = arith.constant 0 : index
    %c0_4 = arith.constant 0 : index
    %3 = vector.load %arg3[%c0_3, %c0_4] : memref<1x256xf32, #tpu.memory_space<vmem>>, vector<1x256xf32>
    %4 = vector.broadcast %3 : vector<1x256xf32> to vector<64x256xf32>
    %5 = arith.addf %2, %4 : vector<64x256xf32>
    %c0_5 = arith.constant 0 : index
    %c0_6 = arith.constant 0 : index
    %6 = vector.load %arg7[%c0_5, %c0_6] : memref<64x256xf32, #tpu.memory_space<vmem>>, vector<64x256xf32>
    tpu.vector_store %arg7[%c0_5, %c0_6], %5 {strides = array<i32>} : memref<64x256xf32, #tpu.memory_space<vmem>>, vector<64x256xf32>,
    %cst_7 = arith.constant 0.000000e+00 : f32
    %7 = vector.broadcast %cst_7 : f32 to vector<8x64xf32>
    %cst_8 = arith.constant 0.000000e+00 : f32
    %8 = vector.broadcast %cst_8 : f32 to vector<8x64xf32>
    %c0_9 = arith.constant 0 : index
    %c0_10 = arith.constant 0 : index
    %9 = vector.load %arg7[%c0_9, %c0_10] : memref<64x256xf32, #tpu.memory_space<vmem>>, vector<8x256xf32>
    %10 = arith.truncf %7 : vector<8x64xf32> to vector<8x64xbf16>
    %c0_11 = arith.constant 0 : index
    %c0_12 = arith.constant 0 : index
    %11 = vector.load %arg2[%c0_11, %c0_12] : memref<64x256xbf16, #tpu.memory_space<vmem>>, vector<64x256xbf16>
    %cst_13 = arith.constant dense<0.000000e+00> : vector<8x256xf32>
    %12 = tpu.matmul %10, %11, %cst_13 {dimension_numbers = #tpu.dot_dimension_numbers<[1], [0], [0], [1], [0, 0, 1, 1], [], []>} : vector<8x64xbf16>, vector<64x256xbf16>, vector<8x256xf32> -> vector<8x256xf32>
    %13 = arith.addf %9, %12 : vector<8x256xf32>
    %14 = vector.extract_strided_slice %13 {offsets = [0, 0], sizes = [8, 192], strides = [1, 1]} : vector<8x256xf32> to vector<8x192xf32>
    %15 = arith.negf %14 : vector<8x192xf32>
    %16 = math.exp %15 : vector<8x192xf32>
    %cst_14 = arith.constant 1.000000e+00 : f32
    %17 = vector.broadcast %cst_14 : f32 to vector<8x192xf32>
    %18 = arith.addf %17, %16 : vector<8x192xf32>
    %19 = arith.divf %17, %18 : vector<8x192xf32>
    %20 = vector.extract_strided_slice %13 {offsets = [0, 192], sizes = [8, 64], strides = [1, 1]} : vector<8x256xf32> to vector<8x64xf32>
    %21 = math.tanh %20 : vector<8x64xf32>
    %22 = vector.extract_strided_slice %19 {offsets = [0, 0], sizes = [8, 64], strides = [1, 1]} : vector<8x192xf32> to vector<8x64xf32>
    %23 = vector.extract_strided_slice %19 {offsets = [0, 64], sizes = [8, 64], strides = [1, 1]} : vector<8x192xf32> to vector<8x64xf32>
    %24 = vector.extract_strided_slice %19 {offsets = [0, 128], sizes = [8, 64], strides = [1, 1]} : vector<8x192xf32> to vector<8x64xf32>
    %25 = arith.mulf %23, %8 : vector<8x64xf32>
    %26 = arith.mulf %22, %21 : vector<8x64xf32>
    %27 = arith.addf %25, %26 : vector<8x64xf32>
    %28 = math.tanh %27 : vector<8x64xf32>
    %29 = arith.mulf %24, %28 : vector<8x64xf32>
    %c8 = arith.constant 8 : index
    %c0_15 = arith.constant 0 : index
    %30 = vector.load %arg7[%c8, %c0_15] : memref<64x256xf32, #tpu.memory_space<vmem>>, vector<8x256xf32>
    %31 = arith.truncf %29 : vector<8x64xf32> to vector<8x64xbf16>
    %c0_16 = arith.constant 0 : index
    %c0_17 = arith.constant 0 : index
    %32 = vector.load %arg2[%c0_16, %c0_17] : memref<64x256xbf16, #tpu.memory_space<vmem>>, vector<64x256xbf16>
    %cst_18 = arith.constant dense<0.000000e+00> : vector<8x256xf32>
    %33 = tpu.matmul %31, %32, %cst_18 {dimension_numbers = #tpu.dot_dimension_numbers<[1], [0], [0], [1], [0, 0, 1, 1], [], []>} : vector<8x64xbf16>, vector<64x256xbf16>, vector<8x256xf32> -> vector<8x256xf32>
    %34 = arith.addf %30, %33 : vector<8x256xf32>
    %35 = vector.extract_strided_slice %34 {offsets = [0, 0], sizes = [8, 192], strides = [1, 1]} : vector<8x256xf32> to vector<8x192xf32>
    %36 = arith.negf %35 : vector<8x192xf32>
    %37 = math.exp %36 : vector<8x192xf32>
    %cst_19 = arith.constant 1.000000e+00 : f32
    %38 = vector.broadcast %cst_19 : f32 to vector<8x192xf32>
    %39 = arith.addf %38, %37 : vector<8x192xf32>
    %40 = arith.divf %38, %39 : vector<8x192xf32>
    %41 = vector.extract_strided_slice %34 {offsets = [0, 192], sizes = [8, 64], strides = [1, 1]} : vector<8x256xf32> to vector<8x64xf32>
    %42 = math.tanh %41 : vector<8x64xf32>
    %43 = vector.extract_strided_slice %40 {offsets = [0, 0], sizes = [8, 64], strides = [1, 1]} : vector<8x192xf32> to vector<8x64xf32>
    %44 = vector.extract_strided_slice %40 {offsets = [0, 64], sizes = [8, 64], strides = [1, 1]} : vector<8x192xf32> to vector<8x64xf32>
    %45 = vector.extract_strided_slice %40 {offsets = [0, 128], sizes = [8, 64], strides = [1, 1]} : vector<8x192xf32> to vector<8x64xf32>
    %46 = arith.mulf %44, %27 : vector<8x64xf32>
    %47 = arith.mulf %43, %42 : vector<8x64xf32>
    %48 = arith.addf %46, %47 : vector<8x64xf32>
    %49 = math.tanh %48 : vector<8x64xf32>
    %50 = arith.mulf %45, %49 : vector<8x64xf32>
    %c16 = arith.constant 16 : index
    %c0_20 = arith.constant 0 : index
    %51 = vector.load %arg7[%c16, %c0_20] : memref<64x256xf32, #tpu.memory_space<vmem>>, vector<8x256xf32>
    %52 = arith.truncf %50 : vector<8x64xf32> to vector<8x64xbf16>
    %c0_21 = arith.constant 0 : index
    %c0_22 = arith.constant 0 : index
    %53 = vector.load %arg2[%c0_21, %c0_22] : memref<64x256xbf16, #tpu.memory_space<vmem>>, vector<64x256xbf16>
    %cst_23 = arith.constant dense<0.000000e+00> : vector<8x256xf32>
    %54 = tpu.matmul %52, %53, %cst_23 {dimension_numbers = #tpu.dot_dimension_numbers<[1], [0], [0], [1], [0, 0, 1, 1], [], []>} : vector<8x64xbf16>, vector<64x256xbf16>, vector<8x256xf32> -> vector<8x256xf32>
    %55 = arith.addf %51, %54 : vector<8x256xf32>
    %56 = vector.extract_strided_slice %55 {offsets = [0, 0], sizes = [8, 192], strides = [1, 1]} : vector<8x256xf32> to vector<8x192xf32>
    %57 = arith.negf %56 : vector<8x192xf32>
    %58 = math.exp %57 : vector<8x192xf32>
    %cst_24 = arith.constant 1.000000e+00 : f32
    %59 = vector.broadcast %cst_24 : f32 to vector<8x192xf32>
    %60 = arith.addf %59, %58 : vector<8x192xf32>
    %61 = arith.divf %59, %60 : vector<8x192xf32>
    %62 = vector.extract_strided_slice %55 {offsets = [0, 192], sizes = [8, 64], strides = [1, 1]} : vector<8x256xf32> to vector<8x64xf32>
    %63 = math.tanh %62 : vector<8x64xf32>
    %64 = vector.extract_strided_slice %61 {offsets = [0, 0], sizes = [8, 64], strides = [1, 1]} : vector<8x192xf32> to vector<8x64xf32>
    %65 = vector.extract_strided_slice %61 {offsets = [0, 64], sizes = [8, 64], strides = [1, 1]} : vector<8x192xf32> to vector<8x64xf32>
    %66 = vector.extract_strided_slice %61 {offsets = [0, 128], sizes = [8, 64], strides = [1, 1]} : vector<8x192xf32> to vector<8x64xf32>
    %67 = arith.mulf %65, %48 : vector<8x64xf32>
    %68 = arith.mulf %64, %63 : vector<8x64xf32>
    %69 = arith.addf %67, %68 : vector<8x64xf32>
    %70 = math.tanh %69 : vector<8x64xf32>
    %71 = arith.mulf %66, %70 : vector<8x64xf32>
    %c24 = arith.constant 24 : index
    %c0_25 = arith.constant 0 : index
    %72 = vector.load %arg7[%c24, %c0_25] : memref<64x256xf32, #tpu.memory_space<vmem>>, vector<8x256xf32>
    %73 = arith.truncf %71 : vector<8x64xf32> to vector<8x64xbf16>
    %c0_26 = arith.constant 0 : index
    %c0_27 = arith.constant 0 : index
    %74 = vector.load %arg2[%c0_26, %c0_27] : memref<64x256xbf16, #tpu.memory_space<vmem>>, vector<64x256xbf16>
    %cst_28 = arith.constant dense<0.000000e+00> : vector<8x256xf32>
    %75 = tpu.matmul %73, %74, %cst_28 {dimension_numbers = #tpu.dot_dimension_numbers<[1], [0], [0], [1], [0, 0, 1, 1], [], []>} : vector<8x64xbf16>, vector<64x256xbf16>, vector<8x256xf32> -> vector<8x256xf32>
    %76 = arith.addf %72, %75 : vector<8x256xf32>
    %77 = vector.extract_strided_slice %76 {offsets = [0, 0], sizes = [8, 192], strides = [1, 1]} : vector<8x256xf32> to vector<8x192xf32>
    %78 = arith.negf %77 : vector<8x192xf32>
    %79 = math.exp %78 : vector<8x192xf32>
    %cst_29 = arith.constant 1.000000e+00 : f32
    %80 = vector.broadcast %cst_29 : f32 to vector<8x192xf32>
    %81 = arith.addf %80, %79 : vector<8x192xf32>
    %82 = arith.divf %80, %81 : vector<8x192xf32>
    %83 = vector.extract_strided_slice %76 {offsets = [0, 192], sizes = [8, 64], strides = [1, 1]} : vector<8x256xf32> to vector<8x64xf32>
    %84 = math.tanh %83 : vector<8x64xf32>
    %85 = vector.extract_strided_slice %82 {offsets = [0, 0], sizes = [8, 64], strides = [1, 1]} : vector<8x192xf32> to vector<8x64xf32>
    %86 = vector.extract_strided_slice %82 {offsets = [0, 64], sizes = [8, 64], strides = [1, 1]} : vector<8x192xf32> to vector<8x64xf32>
    %87 = vector.extract_strided_slice %82 {offsets = [0, 128], sizes = [8, 64], strides = [1, 1]} : vector<8x192xf32> to vector<8x64xf32>
    %88 = arith.mulf %86, %69 : vector<8x64xf32>
    %89 = arith.mulf %85, %84 : vector<8x64xf32>
    %90 = arith.addf %88, %89 : vector<8x64xf32>
    %91 = math.tanh %90 : vector<8x64xf32>
    %92 = arith.mulf %87, %91 : vector<8x64xf32>
    %c32 = arith.constant 32 : index
    %c0_30 = arith.constant 0 : index
    %93 = vector.load %arg7[%c32, %c0_30] : memref<64x256xf32, #tpu.memory_space<vmem>>, vector<8x256xf32>
    %94 = arith.truncf %92 : vector<8x64xf32> to vector<8x64xbf16>
    %c0_31 = arith.constant 0 : index
    %c0_32 = arith.constant 0 : index
    %95 = vector.load %arg2[%c0_31, %c0_32] : memref<64x256xbf16, #tpu.memory_space<vmem>>, vector<64x256xbf16>
    %cst_33 = arith.constant dense<0.000000e+00> : vector<8x256xf32>
    %96 = tpu.matmul %94, %95, %cst_33 {dimension_numbers = #tpu.dot_dimension_numbers<[1], [0], [0], [1], [0, 0, 1, 1], [], []>} : vector<8x64xbf16>, vector<64x256xbf16>, vector<8x256xf32> -> vector<8x256xf32>
    %97 = arith.addf %93, %96 : vector<8x256xf32>
    %98 = vector.extract_strided_slice %97 {offsets = [0, 0], sizes = [8, 192], strides = [1, 1]} : vector<8x256xf32> to vector<8x192xf32>
    %99 = arith.negf %98 : vector<8x192xf32>
    %100 = math.exp %99 : vector<8x192xf32>
    %cst_34 = arith.constant 1.000000e+00 : f32
    %101 = vector.broadcast %cst_34 : f32 to vector<8x192xf32>
    %102 = arith.addf %101, %100 : vector<8x192xf32>
    %103 = arith.divf %101, %102 : vector<8x192xf32>
    %104 = vector.extract_strided_slice %97 {offsets = [0, 192], sizes = [8, 64], strides = [1, 1]} : vector<8x256xf32> to vector<8x64xf32>
    %105 = math.tanh %104 : vector<8x64xf32>
    %106 = vector.extract_strided_slice %103 {offsets = [0, 0], sizes = [8, 64], strides = [1, 1]} : vector<8x192xf32> to vector<8x64xf32>
    %107 = vector.extract_strided_slice %103 {offsets = [0, 64], sizes = [8, 64], strides = [1, 1]} : vector<8x192xf32> to vector<8x64xf32>
    %108 = vector.extract_strided_slice %103 {offsets = [0, 128], sizes = [8, 64], strides = [1, 1]} : vector<8x192xf32> to vector<8x64xf32>
    %109 = arith.mulf %107, %90 : vector<8x64xf32>
    %110 = arith.mulf %106, %105 : vector<8x64xf32>
    %111 = arith.addf %109, %110 : vector<8x64xf32>
    %112 = math.tanh %111 : vector<8x64xf32>
    %113 = arith.mulf %108, %112 : vector<8x64xf32>
    %c40 = arith.constant 40 : index
    %c0_35 = arith.constant 0 : index
    %114 = vector.load %arg7[%c40, %c0_35] : memref<64x256xf32, #tpu.memory_space<vmem>>, vector<8x256xf32>
    %115 = arith.truncf %113 : vector<8x64xf32> to vector<8x64xbf16>
    %c0_36 = arith.constant 0 : index
    %c0_37 = arith.constant 0 : index
    %116 = vector.load %arg2[%c0_36, %c0_37] : memref<64x256xbf16, #tpu.memory_space<vmem>>, vector<64x256xbf16>
    %cst_38 = arith.constant dense<0.000000e+00> : vector<8x256xf32>
    %117 = tpu.matmul %115, %116, %cst_38 {dimension_numbers = #tpu.dot_dimension_numbers<[1], [0], [0], [1], [0, 0, 1, 1], [], []>} : vector<8x64xbf16>, vector<64x256xbf16>, vector<8x256xf32> -> vector<8x256xf32>
    %118 = arith.addf %114, %117 : vector<8x256xf32>
    %119 = vector.extract_strided_slice %118 {offsets = [0, 0], sizes = [8, 192], strides = [1, 1]} : vector<8x256xf32> to vector<8x192xf32>
    %120 = arith.negf %119 : vector<8x192xf32>
    %121 = math.exp %120 : vector<8x192xf32>
    %cst_39 = arith.constant 1.000000e+00 : f32
    %122 = vector.broadcast %cst_39 : f32 to vector<8x192xf32>
    %123 = arith.addf %122, %121 : vector<8x192xf32>
    %124 = arith.divf %122, %123 : vector<8x192xf32>
    %125 = vector.extract_strided_slice %118 {offsets = [0, 192], sizes = [8, 64], strides = [1, 1]} : vector<8x256xf32> to vector<8x64xf32>
    %126 = math.tanh %125 : vector<8x64xf32>
    %127 = vector.extract_strided_slice %124 {offsets = [0, 0], sizes = [8, 64], strides = [1, 1]} : vector<8x192xf32> to vector<8x64xf32>
    %128 = vector.extract_strided_slice %124 {offsets = [0, 64], sizes = [8, 64], strides = [1, 1]} : vector<8x192xf32> to vector<8x64xf32>
    %129 = vector.extract_strided_slice %124 {offsets = [0, 128], sizes = [8, 64], strides = [1, 1]} : vector<8x192xf32> to vector<8x64xf32>
    %130 = arith.mulf %128, %111 : vector<8x64xf32>
    %131 = arith.mulf %127, %126 : vector<8x64xf32>
    %132 = arith.addf %130, %131 : vector<8x64xf32>
    %133 = math.tanh %132 : vector<8x64xf32>
    %134 = arith.mulf %129, %133 : vector<8x64xf32>
    %c48 = arith.constant 48 : index
    %c0_40 = arith.constant 0 : index
    %135 = vector.load %arg7[%c48, %c0_40] : memref<64x256xf32, #tpu.memory_space<vmem>>, vector<8x256xf32>
    %136 = arith.truncf %134 : vector<8x64xf32> to vector<8x64xbf16>
    %c0_41 = arith.constant 0 : index
    %c0_42 = arith.constant 0 : index
    %137 = vector.load %arg2[%c0_41, %c0_42] : memref<64x256xbf16, #tpu.memory_space<vmem>>, vector<64x256xbf16>
    %cst_43 = arith.constant dense<0.000000e+00> : vector<8x256xf32>
    %138 = tpu.matmul %136, %137, %cst_43 {dimension_numbers = #tpu.dot_dimension_numbers<[1], [0], [0], [1], [0, 0, 1, 1], [], []>} : vector<8x64xbf16>, vector<64x256xbf16>, vector<8x256xf32> -> vector<8x256xf32>
    %139 = arith.addf %135, %138 : vector<8x256xf32>
    %140 = vector.extract_strided_slice %139 {offsets = [0, 0], sizes = [8, 192], strides = [1, 1]} : vector<8x256xf32> to vector<8x192xf32>
    %141 = arith.negf %140 : vector<8x192xf32>
    %142 = math.exp %141 : vector<8x192xf32>
    %cst_44 = arith.constant 1.000000e+00 : f32
    %143 = vector.broadcast %cst_44 : f32 to vector<8x192xf32>
    %144 = arith.addf %143, %142 : vector<8x192xf32>
    %145 = arith.divf %143, %144 : vector<8x192xf32>
    %146 = vector.extract_strided_slice %139 {offsets = [0, 192], sizes = [8, 64], strides = [1, 1]} : vector<8x256xf32> to vector<8x64xf32>
    %147 = math.tanh %146 : vector<8x64xf32>
    %148 = vector.extract_strided_slice %145 {offsets = [0, 0], sizes = [8, 64], strides = [1, 1]} : vector<8x192xf32> to vector<8x64xf32>
    %149 = vector.extract_strided_slice %145 {offsets = [0, 64], sizes = [8, 64], strides = [1, 1]} : vector<8x192xf32> to vector<8x64xf32>
    %150 = vector.extract_strided_slice %145 {offsets = [0, 128], sizes = [8, 64], strides = [1, 1]} : vector<8x192xf32> to vector<8x64xf32>
    %151 = arith.mulf %149, %132 : vector<8x64xf32>
    %152 = arith.mulf %148, %147 : vector<8x64xf32>
    %153 = arith.addf %151, %152 : vector<8x64xf32>
    %154 = math.tanh %153 : vector<8x64xf32>
    %155 = arith.mulf %150, %154 : vector<8x64xf32>
    %c56 = arith.constant 56 : index
    %c0_45 = arith.constant 0 : index
    %156 = vector.load %arg7[%c56, %c0_45] : memref<64x256xf32, #tpu.memory_space<vmem>>, vector<8x256xf32>
    %157 = arith.truncf %155 : vector<8x64xf32> to vector<8x64xbf16>
    %c0_46 = arith.constant 0 : index
    %c0_47 = arith.constant 0 : index
    %158 = vector.load %arg2[%c0_46, %c0_47] : memref<64x256xbf16, #tpu.memory_space<vmem>>, vector<64x256xbf16>
    %cst_48 = arith.constant dense<0.000000e+00> : vector<8x256xf32>
    %159 = tpu.matmul %157, %158, %cst_48 {dimension_numbers = #tpu.dot_dimension_numbers<[1], [0], [0], [1], [0, 0, 1, 1], [], []>} : vector<8x64xbf16>, vector<64x256xbf16>, vector<8x256xf32> -> vector<8x256xf32>
    %160 = arith.addf %156, %159 : vector<8x256xf32>
    %161 = vector.extract_strided_slice %160 {offsets = [0, 0], sizes = [8, 192], strides = [1, 1]} : vector<8x256xf32> to vector<8x192xf32>
    %162 = arith.negf %161 : vector<8x192xf32>
    %163 = math.exp %162 : vector<8x192xf32>
    %cst_49 = arith.constant 1.000000e+00 : f32
    %164 = vector.broadcast %cst_49 : f32 to vector<8x192xf32>
    %165 = arith.addf %164, %163 : vector<8x192xf32>
    %166 = arith.divf %164, %165 : vector<8x192xf32>
    %167 = vector.extract_strided_slice %160 {offsets = [0, 192], sizes = [8, 64], strides = [1, 1]} : vector<8x256xf32> to vector<8x64xf32>
    %168 = math.tanh %167 : vector<8x64xf32>
    %169 = vector.extract_strided_slice %166 {offsets = [0, 0], sizes = [8, 64], strides = [1, 1]} : vector<8x192xf32> to vector<8x64xf32>
    %170 = vector.extract_strided_slice %166 {offsets = [0, 64], sizes = [8, 64], strides = [1, 1]} : vector<8x192xf32> to vector<8x64xf32>
    %171 = vector.extract_strided_slice %166 {offsets = [0, 128], sizes = [8, 64], strides = [1, 1]} : vector<8x192xf32> to vector<8x64xf32>
    %172 = arith.mulf %170, %153 : vector<8x64xf32>
    %173 = arith.mulf %169, %168 : vector<8x64xf32>
    %174 = arith.addf %172, %173 : vector<8x64xf32>
    %175 = math.tanh %174 : vector<8x64xf32>
    %176 = arith.mulf %171, %175 : vector<8x64xf32>
    %c0_50 = arith.constant 0 : index
    %c0_51 = arith.constant 0 : index
    %177 = vector.load %arg4[%c0_50, %c0_51] : memref<64x128xf32, #tpu.memory_space<vmem>>, vector<64x128xf32>
    %cst_52 = arith.constant dense<0.000000e+00> : vector<8x128xf32>
    %178 = tpu.matmul %176, %177, %cst_52 {dimension_numbers = #tpu.dot_dimension_numbers<[1], [0], [0], [1], [0, 0, 1, 1], [], []>} : vector<8x64xf32>, vector<64x128xf32>, vector<8x128xf32> -> vector<8x128xf32>
    %c0_53 = arith.constant 0 : index
    %c0_54 = arith.constant 0 : index
    %179 = vector.load %arg5[%c0_53, %c0_54] : memref<1x128xf32, #tpu.memory_space<vmem>>, vector<1x128xf32>
    %180 = vector.broadcast %179 : vector<1x128xf32> to vector<8x128xf32>
    %181 = arith.addf %178, %180 : vector<8x128xf32>
    %c0_55 = arith.constant 0 : index
    %c0_56 = arith.constant 0 : index
    %182 = vector.load %arg6[%c0_55, %c0_56] : memref<8x128xf32, #tpu.memory_space<vmem>>, vector<8x128xf32>
    tpu.vector_store %arg6[%c0_55, %c0_56], %181 {strides = array<i32>} : memref<8x128xf32, #tpu.memory_space<vmem>>, vector<8x128xf32>,
    return
  }
}

</mosaic_0001>

<llo_original>
// kernel: rnn_forward.1
$region0: #{rnn_forward.1}
  #allocation0 [shape = 'u32[]', space=smem, size = 0x4, offset = 0x4, fixed_abs, tag = 'smem constant byte address 0x4 - core index']
  #allocation1 [shape = 'u32[72,128]{1,0:T(1,128)}', space=vmem, size = 0x9000, scoped, tag = 'internal scratch']
  #allocation2 [shape = 'f32[64,256]{1,0:T(8,128)}', space=vmem, size = 0x10000, scoped, tag = 'scratch operand']
  %s0 = inlined_call_operand.vmem [shape: bf16[64,28], index: 0, kind: input, shape index: {}]
  %s1 = inlined_call_operand.hbm [shape: bf16[28,256], index: 1, kind: input, shape index: {}]
  %s2 = inlined_call_operand.vmem [shape: bf16[64,256], index: 2, kind: input, shape index: {}]
  %s3 = inlined_call_operand.hbm [shape: f32[1,256], index: 3, kind: input, shape index: {}]
  %s4 = inlined_call_operand.vmem [shape: f32[64,128], index: 4, kind: input, shape index: {}]
  %s5 = inlined_call_operand.vmem [shape: f32[1,128], index: 5, kind: input, shape index: {}]
  %s6 = inlined_call_operand.vmem [shape: f32[8,128], index: 6, kind: output, shape index: {}]
  %s7 = sld [smem:[#allocation0]]
  $region42: #{rnn_forward.1} parent=0
    _
  %s9 = ssub.s32 1, %s7
  %s10 = scalar_select 0, %s9, %s7
  $region1: #{rnn_forward.1} parent=0
    #allocation3 [shape = 'u8[16384]{0}', space=vmem, size = 0x4000, scoped, tag = 'input window, operand 1, single buffered']
    #allocation4 [shape = 's32[1]{0}', space=sflag, size = 0x4, scoped, tag = 'scoped memory for rnn_forward.1']
    #allocation5 [shape = 'u8[1024]{0}', space=vmem, size = 0x400, scoped, tag = 'input window, operand 3, single buffered']
    #allocation6 [shape = 's32[1]{0}', space=sflag, size = 0x4, scoped, tag = 'scoped memory for rnn_forward.1']
    %11 = vsyncpa [#allocation4], 0
    %12 = vsyncpa [#allocation6], 0
    // Predicated region
    $region2: #{rnn_forward.1} parent=1 // pred_check
      _
    $region3: #{rnn_forward.1} parent=1 // pred_check_branch
      %14 = sbr.rel (0) target = $region5
    $region4: #{rnn_forward.1} parent=1 // pred_region
      _
    $region5: #{rnn_forward.1} parent=1 // pred_fallthru
      _
    // Predicated region
    $region6: #{rnn_forward.1} parent=1 // pred_check
      _
    $region7: #{rnn_forward.1} parent=1 // pred_check_branch
      %16 = sbr.rel (0) target = $region9
    $region8: #{rnn_forward.1} parent=1 // pred_region
      %18 = vsyncadd [#allocation4], 0
      %s19 = sshll.u32 %s1, 4
      %s20 = int_to_ptr.hbm [resolvable:$true] %s19
      %s21 = sshll.u32 [#allocation3], 4
      %s22 = int_to_ptr.vmem [resolvable:$true] %s21
      %27 = dma.hbm_to_vmem [thread:$0]  %s20, 512, %s22, [#allocation4], 128, 128, 8
    $region9: #{rnn_forward.1} parent=1 // pred_fallthru
      _
    // Predicated region
    $region10: #{rnn_forward.1} parent=1 // pred_check
      _
    $region11: #{rnn_forward.1} parent=1 // pred_check_branch
      %29 = sbr.rel (0) target = $region13
    $region12: #{rnn_forward.1} parent=1 // pred_region
      _
    $region13: #{rnn_forward.1} parent=1 // pred_fallthru
      _
    // Predicated region
    $region14: #{rnn_forward.1} parent=1 // pred_check
      _
    $region15: #{rnn_forward.1} parent=1 // pred_check_branch
      %31 = sbr.rel (0) target = $region17
    $region16: #{rnn_forward.1} parent=1 // pred_region
      %33 = vsyncadd [#allocation6], 0
      %s35 = sshll.u32 %s3, 4
      %s36 = int_to_ptr.hbm [resolvable:$true] %s35
      %s37 = sshll.u32 [#allocation5], 4
      %s38 = int_to_ptr.vmem [resolvable:$true] %s37
      %40 = dma.hbm_to_vmem [thread:$0]  %s36, 32, %s38, [#allocation6]
    $region17: #{rnn_forward.1} parent=1 // pred_fallthru
      _
    // Predicated region
    $region18: #{rnn_forward.1} parent=1 // pred_check
      _
    $region19: #{rnn_forward.1} parent=1 // pred_check_branch
      %42 = sbr.rel (0) target = $region21
    $region20: #{rnn_forward.1} parent=1 // pred_region
      _
    $region21: #{rnn_forward.1} parent=1 // pred_fallthru
      _
    // Predicated region
    $region22: #{rnn_forward.1} parent=1 // pred_check
      _
    $region23: #{rnn_forward.1} parent=1 // pred_check_branch
      %44 = sbr.rel (0) target = $region25
    $region24: #{rnn_forward.1} parent=1 // pred_region
      _
    $region25: #{rnn_forward.1} parent=1 // pred_fallthru
      _
    // Predicated region
    $region26: #{rnn_forward.1} parent=1 // pred_check
      _
    $region27: #{rnn_forward.1} parent=1 // pred_check_branch
      %46 = sbr.rel (0) target = $region29
    $region28: #{rnn_forward.1} parent=1 // pred_region
      %48 = dma.done [#allocation4], 512
    $region29: #{rnn_forward.1} parent=1 // pred_fallthru
      _
    // Predicated region
    $region30: #{rnn_forward.1} parent=1 // pred_check
      _
    $region31: #{rnn_forward.1} parent=1 // pred_check_branch
      %50 = sbr.rel (0) target = $region33
    $region32: #{rnn_forward.1} parent=1 // pred_region
      %52 = dma.done [#allocation6], 32
    $region33: #{rnn_forward.1} parent=1 // pred_fallthru
      _
    %v54 = vld [vmem:[%s0] sm:$0xf]
    %v55 = vld [vmem:[%s0 + $0x4] sm:$0xf]
    %v56 = vld [vmem:[%s0 + $0x8] sm:$0xf]
    %v57 = vld [vmem:[%s0 + $0xc] sm:$0xf]
    %v58 = vld [vmem:[%s0 + $0x10] sm:$0xf]
    %v59 = vld [vmem:[%s0 + $0x14] sm:$0xf]
    %v60 = vld [vmem:[%s0 + $0x18] sm:$0xf]
    %v61 = vld [vmem:[%s0 + $0x1c] sm:$0xf]
    %v62 = vld [vmem:[#allocation3] sm:$0xff]
    %v63 = vld [vmem:[#allocation3 + $0x8] sm:$0xff]
    %v64 = vld [vmem:[#allocation3 + $0x10] sm:$0xff]
    %v65 = vld [vmem:[#allocation3 + $0x18] sm:$0x33]
    %v66 = vld [vmem:[#allocation5] sm:$0x3]
    %v68 = vperm.slane %v66, 0
    %v69 = vperm.slane %v66, 1
    %v80 = vunpack.c.l.b16 %v54
    %v81 = vunpack.c.l.b16 %v55
    %v82 = vunpack.c.l.b16 %v56
    %v83 = vunpack.c.l.b16 %v57
    %v84 = vunpack.c.l.b16 %v58
    %v85 = vunpack.c.l.b16 %v59
    %v86 = vunpack.c.l.b16 %v60
    %v87 = vunpack.c.l.b16 %v61
    %v88 = vpack.c.b16 %v81, %v80
    %v89 = vpack.c.b16 %v83, %v82
    %v90 = vpack.c.b16 %v85, %v84
    %v91 = vpack.c.b16 %v87, %v86
    %v96 = vunpack.c.l.b16 %v62
    %v97 = vunpack.c.h.b16 %v62
    %v98 = vunpack.c.l.b16 %v63
    %v99 = vunpack.c.h.b16 %v63
    %v100 = vunpack.c.l.b16 %v64
    %v101 = vunpack.c.h.b16 %v64
    %v102 = vunpack.c.l.b16 %v65
    %v103 = vunpack.c.h.b16 %v65
    %v104 = vpack.c.b16 %v98, %v96
    %v105 = vpack.c.b16 %v99, %v97
    %v106 = vpack.c.b16 %v102, %v100
    %v107 = vpack.c.b16 %v103, %v101
    %vm110 = vcmask 228352
    %v112 = vsel %vm110, %v88, 0
    %v115 = vsel %vm110, %v89, 0
    %v118 = vsel %vm110, %v90, 0
    %v121 = vsel %vm110, %v91, 0
    %vm123 = vcmask 1045504
    %v125 = vsel %vm123, %v106, 0
    %v128 = vsel %vm123, %v107, 0
    %130 = vmatpush.bf16.msra.mxu0 0
    %131 = vmatpush.bf16.msra.mxu0 0
    %132 = vmatpush.bf16.msra.mxu0 0
    %133 = vmatpush.bf16.msra.mxu0 0
    %134 = vmatpush.bf16.msra.mxu0 0
    %135 = vmatpush.bf16.msra.mxu0 0
    %136 = vmatpush.bf16.msra.mxu0 %v125
    %137 = vmatpush.bf16.msra.mxu0 %v104
    %138 = vmatmul.bf16.gmra.mxu0 %v112
    %v139 = vpop.f32.mrf.mxu0
    %v140 = vadd.f32 %v68, %v139
    %v141 = vpop.f32.mrf.mxu0
    %v142 = vadd.f32 %v68, %v141
    %143 = vmatmul.bf16.gmra.mxu0 %v115
    %v144 = vpop.f32.mrf.mxu0
    %v145 = vadd.f32 %v68, %v144
    %v146 = vpop.f32.mrf.mxu0
    %v147 = vadd.f32 %v68, %v146
    %148 = vmatmul.bf16.gmra.mxu0 %v118
    %v149 = vpop.f32.mrf.mxu0
    %v150 = vadd.f32 %v68, %v149
    %v151 = vpop.f32.mrf.mxu0
    %v152 = vadd.f32 %v68, %v151
    %153 = vmatmul.bf16.gmra.mxu0 %v121
    %v154 = vpop.f32.mrf.mxu0
    %v155 = vadd.f32 %v68, %v154
    %v156 = vpop.f32.mrf.mxu0
    %v157 = vadd.f32 %v68, %v156
    %158 = vdwg.mxu0
    %159 = vmatpush.bf16.msra.mxu0 0
    %160 = vmatpush.bf16.msra.mxu0 0
    %161 = vmatpush.bf16.msra.mxu0 0
    %162 = vmatpush.bf16.msra.mxu0 0
    %163 = vmatpush.bf16.msra.mxu0 0
    %164 = vmatpush.bf16.msra.mxu0 0
    %165 = vmatpush.bf16.msra.mxu0 %v128
    %166 = vmatpush.bf16.msra.mxu0 %v105
    %167 = vmatmul.bf16.gmra.mxu0 %v112
    %v168 = vpop.f32.mrf.mxu0
    %v169 = vadd.f32 %v69, %v168
    %v170 = vpop.f32.mrf.mxu0
    %v171 = vadd.f32 %v69, %v170
    %172 = vmatmul.bf16.gmra.mxu0 %v115
    %v173 = vpop.f32.mrf.mxu0
    %v174 = vadd.f32 %v69, %v173
    %v175 = vpop.f32.mrf.mxu0
    %v176 = vadd.f32 %v69, %v175
    %177 = vmatmul.bf16.gmra.mxu0 %v118
    %v178 = vpop.f32.mrf.mxu0
    %v179 = vadd.f32 %v69, %v178
    %v180 = vpop.f32.mrf.mxu0
    %v181 = vadd.f32 %v69, %v180
    %182 = vmatmul.bf16.gmra.mxu0 %v121
    %v183 = vpop.f32.mrf.mxu0
    %v184 = vadd.f32 %v69, %v183
    %v185 = vpop.f32.mrf.mxu0
    %v186 = vadd.f32 %v69, %v185
    %187 = vdwg.mxu0
    %188 = vst [vmem:[#allocation2] sm:$0xff] %v140
    %189 = vst [vmem:[#allocation2 + $0x8] sm:$0xff] %v169
    %190 = vst [vmem:[#allocation2 + $0x10] sm:$0xff] %v142
    %191 = vst [vmem:[#allocation2 + $0x18] sm:$0xff] %v171
    %192 = vst [vmem:[#allocation2 + $0x20] sm:$0xff] %v145
    %193 = vst [vmem:[#allocation2 + $0x28] sm:$0xff] %v174
    %194 = vst [vmem:[#allocation2 + $0x30] sm:$0xff] %v147
    %195 = vst [vmem:[#allocation2 + $0x38] sm:$0xff] %v176
    %196 = vst [vmem:[#allocation2 + $0x40] sm:$0xff] %v150
    %197 = vst [vmem:[#allocation2 + $0x48] sm:$0xff] %v179
    %198 = vst [vmem:[#allocation2 + $0x50] sm:$0xff] %v152
    %199 = vst [vmem:[#allocation2 + $0x58] sm:$0xff] %v181
    %200 = vst [vmem:[#allocation2 + $0x60] sm:$0xff] %v155
    %201 = vst [vmem:[#allocation2 + $0x68] sm:$0xff] %v184
    %202 = vst [vmem:[#allocation2 + $0x70] sm:$0xff] %v157
    %203 = vst [vmem:[#allocation2 + $0x78] sm:$0xff] %v186
    %v204 = vld [vmem:[#allocation2] sm:$0xff]
    %v205 = vld [vmem:[#allocation2 + $0x8] sm:$0xff]
    %v206 = vld [vmem:[%s2] sm:$0xff]
    %v207 = vld [vmem:[%s2 + $0x8] sm:$0xff]
    %v208 = vld [vmem:[%s2 + $0x10] sm:$0xff]
    %v209 = vld [vmem:[%s2 + $0x18] sm:$0xff]
    %v210 = vld [vmem:[%s2 + $0x20] sm:$0xff]
    %v211 = vld [vmem:[%s2 + $0x28] sm:$0xff]
    %v212 = vld [vmem:[%s2 + $0x30] sm:$0xff]
    %v213 = vld [vmem:[%s2 + $0x38] sm:$0xff]
    %v222 = vunpack.c.l.b16 %v206
    %v223 = vunpack.c.h.b16 %v206
    %v224 = vunpack.c.l.b16 %v207
    %v225 = vunpack.c.h.b16 %v207
    %v226 = vunpack.c.l.b16 %v208
    %v227 = vunpack.c.h.b16 %v208
    %v228 = vunpack.c.l.b16 %v209
    %v229 = vunpack.c.h.b16 %v209
    %v230 = vunpack.c.l.b16 %v210
    %v231 = vunpack.c.h.b16 %v210
    %v232 = vunpack.c.l.b16 %v211
    %v233 = vunpack.c.h.b16 %v211
    %v234 = vunpack.c.l.b16 %v212
    %v235 = vunpack.c.h.b16 %v212
    %v236 = vunpack.c.l.b16 %v213
    %v237 = vunpack.c.h.b16 %v213
    %v238 = vpack.c.b16 %v224, %v222
    %v239 = vpack.c.b16 %v225, %v223
    %v240 = vpack.c.b16 %v228, %v226
    %v241 = vpack.c.b16 %v229, %v227
    %v242 = vpack.c.b16 %v232, %v230
    %v243 = vpack.c.b16 %v233, %v231
    %v244 = vpack.c.b16 %v236, %v234
    %v245 = vpack.c.b16 %v237, %v235
    %vm254 = vcmask 523264
    %v256 = vsel %vm254, 0, 0
    %258 = vmatpush.bf16.msra.mxu0 0
    %259 = vmatpush.bf16.msra.mxu0 0
    %260 = vmatpush.bf16.msra.mxu0 0
    %261 = vmatpush.bf16.msra.mxu0 0
    %262 = vmatpush.bf16.msra.mxu0 %v244
    %263 = vmatpush.bf16.msra.mxu0 %v242
    %264 = vmatpush.bf16.msra.mxu0 %v240
    %265 = vmatpush.bf16.msra.mxu0 %v238
    %266 = vmatmul.bf16.gmra.mxu0 %v256
    %v267 = vpop.f32.mrf.mxu0
    %v268 = vadd.f32 0.0, %v267
    %v269 = vpop.f32.mrf.mxu0
    %270 = vdwg.mxu0
    %271 = vmatpush.bf16.msra.mxu0 0
    %272 = vmatpush.bf16.msra.mxu0 0
    %273 = vmatpush.bf16.msra.mxu0 0
    %274 = vmatpush.bf16.msra.mxu0 0
    %275 = vmatpush.bf16.msra.mxu0 %v245
    %276 = vmatpush.bf16.msra.mxu0 %v243
    %277 = vmatpush.bf16.msra.mxu0 %v241
    %278 = vmatpush.bf16.msra.mxu0 %v239
    %279 = vmatmul.bf16.gmra.mxu0 %v256
    %v280 = vpop.f32.mrf.mxu0
    %v281 = vadd.f32 0.0, %v280
    %v282 = vpop.f32.mrf.mxu0
    %283 = vdwg.mxu0
    %v284 = vadd.f32 %v204, %v268
    %v285 = vadd.f32 %v205, %v281
    %v286 = vxor.u32 %v284, 2147483648
    %v287 = vxor.u32 %v285, 2147483648
    %v288 = vmul.f32 %v286, 1.442695
    %v289 = vpow.pop %v288
    %v290 = vmul.f32 %v287, 1.442695
    %v291 = vpow.pop %v290
    %v292 = vadd.f32 %v289, 1.0
    %v293 = vadd.f32 %v291, 1.0
    %v294 = vrcp.pop %v292
    %v295 = vmul.f32 %v292, %v294
    %v296 = vsub.f32 1.0, %v295
    %v297 = vmul.f32 %v294, %v296
    %v298 = vadd.f32 %v294, %v297
    %vm299 = vweird.f32 %v292
    %vm300 = vweird.f32 %v294
    %vm301 = vmor %vm299, %vm300
    %v302 = vsel %vm301, %v294, %v298
    %v303 = vand.u32 2147483647, %v292
    %vm304 = vcmp.eq.f32.partialorder %v303, 8.507059e+37
    %v305 = vand.u32 %v292, 2147483648
    %v306 = vor.u32 1.1754944e-38, %v305
    %v307 = vsel %vm304, %v306, %v302
    %v308 = vmul.f32 1.0, %v307
    %v309 = vrcp.pop %v293
    %v310 = vmul.f32 %v293, %v309
    %v311 = vsub.f32 1.0, %v310
    %v312 = vmul.f32 %v309, %v311
    %v313 = vadd.f32 %v309, %v312
    %vm314 = vweird.f32 %v293
    %vm315 = vweird.f32 %v309
    %vm316 = vmor %vm314, %vm315
    %v317 = vsel %vm316, %v309, %v313
    %v318 = vand.u32 2147483647, %v293
    %vm319 = vcmp.eq.f32.partialorder %v318, 8.507059e+37
    %v320 = vand.u32 %v293, 2147483648
    %v321 = vor.u32 1.1754944e-38, %v320
    %v322 = vsel %vm319, %v321, %v317
    %v323 = vmul.f32 1.0, %v322
    %v324 = vtanh.pop %v285
    %v325 = vmul.f32 %v308, 0.0
    %327 = vrot.lane.b32.xlu0 %v324, 64
    %v328 = vpop.permute.xlu0 %327
    %v330 = vmul.f32 %v308, %v328
    %332 = vrot.lane.b32.xlu0 %v330, 64
    %v333 = vpop.permute.xlu0 %332
    %v335 = vadd.f32 %v325, %v333
    %v336 = vtanh.pop %v335
    %338 = vrot.lane.b32.xlu0 %v336, 64
    %v339 = vpop.permute.xlu0 %338
    %v341 = vmul.f32 %v323, %v339
    %v342 = vld [vmem:[#allocation2 + $0x10] sm:$0xff]
    %v343 = vld [vmem:[#allocation2 + $0x18] sm:$0xff]
    %v344 = vpack.c.bf16 %v341, %v341
    %v346 = vsel %vm254, %v344, 0
    %348 = vmatpush.bf16.msra.mxu0 0
    %349 = vmatpush.bf16.msra.mxu0 0
    %350 = vmatpush.bf16.msra.mxu0 0
    %351 = vmatpush.bf16.msra.mxu0 0
    %352 = vmatpush.bf16.msra.mxu0 %v244
    %353 = vmatpush.bf16.msra.mxu0 %v242
    %354 = vmatpush.bf16.msra.mxu0 %v240
    %355 = vmatpush.bf16.msra.mxu0 %v238
    %356 = vmatmul.bf16.gmra.mxu0 %v346
    %v357 = vpop.f32.mrf.mxu0
    %v358 = vadd.f32 0.0, %v357
    %v359 = vpop.f32.mrf.mxu0
    %360 = vdwg.mxu0
    %361 = vmatpush.bf16.msra.mxu0 0
    %362 = vmatpush.bf16.msra.mxu0 0
    %363 = vmatpush.bf16.msra.mxu0 0
    %364 = vmatpush.bf16.msra.mxu0 0
    %365 = vmatpush.bf16.msra.mxu0 %v245
    %366 = vmatpush.bf16.msra.mxu0 %v243
    %367 = vmatpush.bf16.msra.mxu0 %v241
    %368 = vmatpush.bf16.msra.mxu0 %v239
    %369 = vmatmul.bf16.gmra.mxu0 %v346
    %v370 = vpop.f32.mrf.mxu0
    %v371 = vadd.f32 0.0, %v370
    %v372 = vpop.f32.mrf.mxu0
    %373 = vdwg.mxu0
    %v374 = vadd.f32 %v342, %v358
    %v375 = vadd.f32 %v343, %v371
    %v376 = vxor.u32 %v374, 2147483648
    %v377 = vxor.u32 %v375, 2147483648
    %v378 = vmul.f32 %v376, 1.442695
    %v379 = vpow.pop %v378
    %v380 = vmul.f32 %v377, 1.442695
    %v381 = vpow.pop %v380
    %v382 = vadd.f32 %v379, 1.0
    %v383 = vadd.f32 %v381, 1.0
    %v384 = vrcp.pop %v382
    %v385 = vmul.f32 %v382, %v384
    %v386 = vsub.f32 1.0, %v385
    %v387 = vmul.f32 %v384, %v386
    %v388 = vadd.f32 %v384, %v387
    %vm389 = vweird.f32 %v382
    %vm390 = vweird.f32 %v384
    %vm391 = vmor %vm389, %vm390
    %v392 = vsel %vm391, %v384, %v388
    %v393 = vand.u32 2147483647, %v382
    %vm394 = vcmp.eq.f32.partialorder %v393, 8.507059e+37
    %v395 = vand.u32 %v382, 2147483648
    %v396 = vor.u32 1.1754944e-38, %v395
    %v397 = vsel %vm394, %v396, %v392
    %v398 = vmul.f32 1.0, %v397
    %v399 = vrcp.pop %v383
    %v400 = vmul.f32 %v383, %v399
    %v401 = vsub.f32 1.0, %v400
    %v402 = vmul.f32 %v399, %v401
    %v403 = vadd.f32 %v399, %v402
    %vm404 = vweird.f32 %v383
    %vm405 = vweird.f32 %v399
    %vm406 = vmor %vm404, %vm405
    %v407 = vsel %vm406, %v399, %v403
    %v408 = vand.u32 2147483647, %v383
    %vm409 = vcmp.eq.f32.partialorder %v408, 8.507059e+37
    %v410 = vand.u32 %v383, 2147483648
    %v411 = vor.u32 1.1754944e-38, %v410
    %v412 = vsel %vm409, %v411, %v407
    %v413 = vmul.f32 1.0, %v412
    %v414 = vtanh.pop %v375
    %v415 = vmul.f32 %v398, %v335
    %417 = vrot.lane.b32.xlu0 %v414, 64
    %v418 = vpop.permute.xlu0 %417
    %v420 = vmul.f32 %v398, %v418
    %422 = vrot.lane.b32.xlu0 %v420, 64
    %v423 = vpop.permute.xlu0 %422
    %v425 = vadd.f32 %v415, %v423
    %v426 = vtanh.pop %v425
    %428 = vrot.lane.b32.xlu0 %v426, 64
    %v429 = vpop.permute.xlu0 %428
    %v431 = vmul.f32 %v413, %v429
    %v432 = vld [vmem:[#allocation2 + $0x20] sm:$0xff]
    %v433 = vld [vmem:[#allocation2 + $0x28] sm:$0xff]
    %v434 = vpack.c.bf16 %v431, %v431
    %v436 = vsel %vm254, %v434, 0
    %438 = vmatpush.bf16.msra.mxu0 0
    %439 = vmatpush.bf16.msra.mxu0 0
    %440 = vmatpush.bf16.msra.mxu0 0
    %441 = vmatpush.bf16.msra.mxu0 0
    %442 = vmatpush.bf16.msra.mxu0 %v244
    %443 = vmatpush.bf16.msra.mxu0 %v242
    %444 = vmatpush.bf16.msra.mxu0 %v240
    %445 = vmatpush.bf16.msra.mxu0 %v238
    %446 = vmatmul.bf16.gmra.mxu0 %v436
    %v447 = vpop.f32.mrf.mxu0
    %v448 = vadd.f32 0.0, %v447
    %v449 = vpop.f32.mrf.mxu0
    %450 = vdwg.mxu0
    %451 = vmatpush.bf16.msra.mxu0 0
    %452 = vmatpush.bf16.msra.mxu0 0
    %453 = vmatpush.bf16.msra.mxu0 0
    %454 = vmatpush.bf16.msra.mxu0 0
    %455 = vmatpush.bf16.msra.mxu0 %v245
    %456 = vmatpush.bf16.msra.mxu0 %v243
    %457 = vmatpush.bf16.msra.mxu0 %v241
    %458 = vmatpush.bf16.msra.mxu0 %v239
    %459 = vmatmul.bf16.gmra.mxu0 %v436
    %v460 = vpop.f32.mrf.mxu0
    %v461 = vadd.f32 0.0, %v460
    %v462 = vpop.f32.mrf.mxu0
    %463 = vdwg.mxu0
    %v464 = vadd.f32 %v432, %v448
    %v465 = vadd.f32 %v433, %v461
    %v466 = vxor.u32 %v464, 2147483648
    %v467 = vxor.u32 %v465, 2147483648
    %v468 = vmul.f32 %v466, 1.442695
    %v469 = vpow.pop %v468
    %v470 = vmul.f32 %v467, 1.442695
    %v471 = vpow.pop %v470
    %v472 = vadd.f32 %v469, 1.0
    %v473 = vadd.f32 %v471, 1.0
    %v474 = vrcp.pop %v472
    %v475 = vmul.f32 %v472, %v474
    %v476 = vsub.f32 1.0, %v475
    %v477 = vmul.f32 %v474, %v476
    %v478 = vadd.f32 %v474, %v477
    %vm479 = vweird.f32 %v472
    %vm480 = vweird.f32 %v474
    %vm481 = vmor %vm479, %vm480
    %v482 = vsel %vm481, %v474, %v478
    %v483 = vand.u32 2147483647, %v472
    %vm484 = vcmp.eq.f32.partialorder %v483, 8.507059e+37
    %v485 = vand.u32 %v472, 2147483648
    %v486 = vor.u32 1.1754944e-38, %v485
    %v487 = vsel %vm484, %v486, %v482
    %v488 = vmul.f32 1.0, %v487
    %v489 = vrcp.pop %v473
    %v490 = vmul.f32 %v473, %v489
    %v491 = vsub.f32 1.0, %v490
    %v492 = vmul.f32 %v489, %v491
    %v493 = vadd.f32 %v489, %v492
    %vm494 = vweird.f32 %v473
    %vm495 = vweird.f32 %v489
    %vm496 = vmor %vm494, %vm495
    %v497 = vsel %vm496, %v489, %v493
    %v498 = vand.u32 2147483647, %v473
    %vm499 = vcmp.eq.f32.partialorder %v498, 8.507059e+37
    %v500 = vand.u32 %v473, 2147483648
    %v501 = vor.u32 1.1754944e-38, %v500
    %v502 = vsel %vm499, %v501, %v497
    %v503 = vmul.f32 1.0, %v502
    %v504 = vtanh.pop %v465
    %v505 = vmul.f32 %v488, %v425
    %507 = vrot.lane.b32.xlu0 %v504, 64
    %v508 = vpop.permute.xlu0 %507
    %v510 = vmul.f32 %v488, %v508
    %512 = vrot.lane.b32.xlu0 %v510, 64
    %v513 = vpop.permute.xlu0 %512
    %v515 = vadd.f32 %v505, %v513
    %v516 = vtanh.pop %v515
    %518 = vrot.lane.b32.xlu0 %v516, 64
    %v519 = vpop.permute.xlu0 %518
    %v521 = vmul.f32 %v503, %v519
    %v522 = vld [vmem:[#allocation2 + $0x30] sm:$0xff]
    %v523 = vld [vmem:[#allocation2 + $0x38] sm:$0xff]
    %v524 = vpack.c.bf16 %v521, %v521
    %v526 = vsel %vm254, %v524, 0
    %528 = vmatpush.bf16.msra.mxu0 0
    %529 = vmatpush.bf16.msra.mxu0 0
    %530 = vmatpush.bf16.msra.mxu0 0
    %531 = vmatpush.bf16.msra.mxu0 0
    %532 = vmatpush.bf16.msra.mxu0 %v244
    %533 = vmatpush.bf16.msra.mxu0 %v242
    %534 = vmatpush.bf16.msra.mxu0 %v240
    %535 = vmatpush.bf16.msra.mxu0 %v238
    %536 = vmatmul.bf16.gmra.mxu0 %v526
    %v537 = vpop.f32.mrf.mxu0
    %v538 = vadd.f32 0.0, %v537
    %v539 = vpop.f32.mrf.mxu0
    %540 = vdwg.mxu0
    %541 = vmatpush.bf16.msra.mxu0 0
    %542 = vmatpush.bf16.msra.mxu0 0
    %543 = vmatpush.bf16.msra.mxu0 0
    %544 = vmatpush.bf16.msra.mxu0 0
    %545 = vmatpush.bf16.msra.mxu0 %v245
    %546 = vmatpush.bf16.msra.mxu0 %v243
    %547 = vmatpush.bf16.msra.mxu0 %v241
    %548 = vmatpush.bf16.msra.mxu0 %v239
    %549 = vmatmul.bf16.gmra.mxu0 %v526
    %v550 = vpop.f32.mrf.mxu0
    %v551 = vadd.f32 0.0, %v550
    %v552 = vpop.f32.mrf.mxu0
    %553 = vdwg.mxu0
    %v554 = vadd.f32 %v522, %v538
    %v555 = vadd.f32 %v523, %v551
    %v556 = vxor.u32 %v554, 2147483648
    %v557 = vxor.u32 %v555, 2147483648
    %v558 = vmul.f32 %v556, 1.442695
    %v559 = vpow.pop %v558
    %v560 = vmul.f32 %v557, 1.442695
    %v561 = vpow.pop %v560
    %v562 = vadd.f32 %v559, 1.0
    %v563 = vadd.f32 %v561, 1.0
    %v564 = vrcp.pop %v562
    %v565 = vmul.f32 %v562, %v564
    %v566 = vsub.f32 1.0, %v565
    %v567 = vmul.f32 %v564, %v566
    %v568 = vadd.f32 %v564, %v567
    %vm569 = vweird.f32 %v562
    %vm570 = vweird.f32 %v564
    %vm571 = vmor %vm569, %vm570
    %v572 = vsel %vm571, %v564, %v568
    %v573 = vand.u32 2147483647, %v562
    %vm574 = vcmp.eq.f32.partialorder %v573, 8.507059e+37
    %v575 = vand.u32 %v562, 2147483648
    %v576 = vor.u32 1.1754944e-38, %v575
    %v577 = vsel %vm574, %v576, %v572
    %v578 = vmul.f32 1.0, %v577
    %v579 = vrcp.pop %v563
    %v580 = vmul.f32 %v563, %v579
    %v581 = vsub.f32 1.0, %v580
    %v582 = vmul.f32 %v579, %v581
    %v583 = vadd.f32 %v579, %v582
    %vm584 = vweird.f32 %v563
    %vm585 = vweird.f32 %v579
    %vm586 = vmor %vm584, %vm585
    %v587 = vsel %vm586, %v579, %v583
    %v588 = vand.u32 2147483647, %v563
    %vm589 = vcmp.eq.f32.partialorder %v588, 8.507059e+37
    %v590 = vand.u32 %v563, 2147483648
    %v591 = vor.u32 1.1754944e-38, %v590
    %v592 = vsel %vm589, %v591, %v587
    %v593 = vmul.f32 1.0, %v592
    %v594 = vtanh.pop %v555
    %v595 = vmul.f32 %v578, %v515
    %597 = vrot.lane.b32.xlu0 %v594, 64
    %v598 = vpop.permute.xlu0 %597
    %v600 = vmul.f32 %v578, %v598
    %602 = vrot.lane.b32.xlu0 %v600, 64
    %v603 = vpop.permute.xlu0 %602
    %v605 = vadd.f32 %v595, %v603
    %v606 = vtanh.pop %v605
    %608 = vrot.lane.b32.xlu0 %v606, 64
    %v609 = vpop.permute.xlu0 %608
    %v611 = vmul.f32 %v593, %v609
    %v612 = vld [vmem:[#allocation2 + $0x40] sm:$0xff]
    %v613 = vld [vmem:[#allocation2 + $0x48] sm:$0xff]
    %v614 = vpack.c.bf16 %v611, %v611
    %v616 = vsel %vm254, %v614, 0
    %618 = vmatpush.bf16.msra.mxu0 0
    %619 = vmatpush.bf16.msra.mxu0 0
    %620 = vmatpush.bf16.msra.mxu0 0
    %621 = vmatpush.bf16.msra.mxu0 0
    %622 = vmatpush.bf16.msra.mxu0 %v244
    %623 = vmatpush.bf16.msra.mxu0 %v242
    %624 = vmatpush.bf16.msra.mxu0 %v240
    %625 = vmatpush.bf16.msra.mxu0 %v238
    %626 = vmatmul.bf16.gmra.mxu0 %v616
    %v627 = vpop.f32.mrf.mxu0
    %v628 = vadd.f32 0.0, %v627
    %v629 = vpop.f32.mrf.mxu0
    %630 = vdwg.mxu0
    %631 = vmatpush.bf16.msra.mxu0 0
    %632 = vmatpush.bf16.msra.mxu0 0
    %633 = vmatpush.bf16.msra.mxu0 0
    %634 = vmatpush.bf16.msra.mxu0 0
    %635 = vmatpush.bf16.msra.mxu0 %v245
    %636 = vmatpush.bf16.msra.mxu0 %v243
    %637 = vmatpush.bf16.msra.mxu0 %v241
    %638 = vmatpush.bf16.msra.mxu0 %v239
    %639 = vmatmul.bf16.gmra.mxu0 %v616
    %v640 = vpop.f32.mrf.mxu0
    %v641 = vadd.f32 0.0, %v640
    %v642 = vpop.f32.mrf.mxu0
    %643 = vdwg.mxu0
    %v644 = vadd.f32 %v612, %v628
    %v645 = vadd.f32 %v613, %v641
    %v646 = vxor.u32 %v644, 2147483648
    %v647 = vxor.u32 %v645, 2147483648
    %v648 = vmul.f32 %v646, 1.442695
    %v649 = vpow.pop %v648
    %v650 = vmul.f32 %v647, 1.442695
    %v651 = vpow.pop %v650
    %v652 = vadd.f32 %v649, 1.0
    %v653 = vadd.f32 %v651, 1.0
    %v654 = vrcp.pop %v652
    %v655 = vmul.f32 %v652, %v654
    %v656 = vsub.f32 1.0, %v655
    %v657 = vmul.f32 %v654, %v656
    %v658 = vadd.f32 %v654, %v657
    %vm659 = vweird.f32 %v652
    %vm660 = vweird.f32 %v654
    %vm661 = vmor %vm659, %vm660
    %v662 = vsel %vm661, %v654, %v658
    %v663 = vand.u32 2147483647, %v652
    %vm664 = vcmp.eq.f32.partialorder %v663, 8.507059e+37
    %v665 = vand.u32 %v652, 2147483648
    %v666 = vor.u32 1.1754944e-38, %v665
    %v667 = vsel %vm664, %v666, %v662
    %v668 = vmul.f32 1.0, %v667
    %v669 = vrcp.pop %v653
    %v670 = vmul.f32 %v653, %v669
    %v671 = vsub.f32 1.0, %v670
    %v672 = vmul.f32 %v669, %v671
    %v673 = vadd.f32 %v669, %v672
    %vm674 = vweird.f32 %v653
    %vm675 = vweird.f32 %v669
    %vm676 = vmor %vm674, %vm675
    %v677 = vsel %vm676, %v669, %v673
    %v678 = vand.u32 2147483647, %v653
    %vm679 = vcmp.eq.f32.partialorder %v678, 8.507059e+37
    %v680 = vand.u32 %v653, 2147483648
    %v681 = vor.u32 1.1754944e-38, %v680
    %v682 = vsel %vm679, %v681, %v677
    %v683 = vmul.f32 1.0, %v682
    %v684 = vtanh.pop %v645
    %v685 = vmul.f32 %v668, %v605
    %687 = vrot.lane.b32.xlu0 %v684, 64
    %v688 = vpop.permute.xlu0 %687
    %v690 = vmul.f32 %v668, %v688
    %692 = vrot.lane.b32.xlu0 %v690, 64
    %v693 = vpop.permute.xlu0 %692
    %v695 = vadd.f32 %v685, %v693
    %v696 = vtanh.pop %v695
    %698 = vrot.lane.b32.xlu0 %v696, 64
    %v699 = vpop.permute.xlu0 %698
    %v701 = vmul.f32 %v683, %v699
    %v702 = vld [vmem:[#allocation2 + $0x50] sm:$0xff]
    %v703 = vld [vmem:[#allocation2 + $0x58] sm:$0xff]
    %v704 = vpack.c.bf16 %v701, %v701
    %v706 = vsel %vm254, %v704, 0
    %708 = vmatpush.bf16.msra.mxu0 0
    %709 = vmatpush.bf16.msra.mxu0 0
    %710 = vmatpush.bf16.msra.mxu0 0
    %711 = vmatpush.bf16.msra.mxu0 0
    %712 = vmatpush.bf16.msra.mxu0 %v244
    %713 = vmatpush.bf16.msra.mxu0 %v242
    %714 = vmatpush.bf16.msra.mxu0 %v240
    %715 = vmatpush.bf16.msra.mxu0 %v238
    %716 = vmatmul.bf16.gmra.mxu0 %v706
    %v717 = vpop.f32.mrf.mxu0
    %v718 = vadd.f32 0.0, %v717
    %v719 = vpop.f32.mrf.mxu0
    %720 = vdwg.mxu0
    %721 = vmatpush.bf16.msra.mxu0 0
    %722 = vmatpush.bf16.msra.mxu0 0
    %723 = vmatpush.bf16.msra.mxu0 0
    %724 = vmatpush.bf16.msra.mxu0 0
    %725 = vmatpush.bf16.msra.mxu0 %v245
    %726 = vmatpush.bf16.msra.mxu0 %v243
    %727 = vmatpush.bf16.msra.mxu0 %v241
    %728 = vmatpush.bf16.msra.mxu0 %v239
    %729 = vmatmul.bf16.gmra.mxu0 %v706
    %v730 = vpop.f32.mrf.mxu0
    %v731 = vadd.f32 0.0, %v730
    %v732 = vpop.f32.mrf.mxu0
    %733 = vdwg.mxu0
    %v734 = vadd.f32 %v702, %v718
    %v735 = vadd.f32 %v703, %v731
    %v736 = vxor.u32 %v734, 2147483648
    %v737 = vxor.u32 %v735, 2147483648
    %v738 = vmul.f32 %v736, 1.442695
    %v739 = vpow.pop %v738
    %v740 = vmul.f32 %v737, 1.442695
    %v741 = vpow.pop %v740
    %v742 = vadd.f32 %v739, 1.0
    %v743 = vadd.f32 %v741, 1.0
    %v744 = vrcp.pop %v742
    %v745 = vmul.f32 %v742, %v744
    %v746 = vsub.f32 1.0, %v745
    %v747 = vmul.f32 %v744, %v746
    %v748 = vadd.f32 %v744, %v747
    %vm749 = vweird.f32 %v742
    %vm750 = vweird.f32 %v744
    %vm751 = vmor %vm749, %vm750
    %v752 = vsel %vm751, %v744, %v748
    %v753 = vand.u32 2147483647, %v742
    %vm754 = vcmp.eq.f32.partialorder %v753, 8.507059e+37
    %v755 = vand.u32 %v742, 2147483648
    %v756 = vor.u32 1.1754944e-38, %v755
    %v757 = vsel %vm754, %v756, %v752
    %v758 = vmul.f32 1.0, %v757
    %v759 = vrcp.pop %v743
    %v760 = vmul.f32 %v743, %v759
    %v761 = vsub.f32 1.0, %v760
    %v762 = vmul.f32 %v759, %v761
    %v763 = vadd.f32 %v759, %v762
    %vm764 = vweird.f32 %v743
    %vm765 = vweird.f32 %v759
    %vm766 = vmor %vm764, %vm765
    %v767 = vsel %vm766, %v759, %v763
    %v768 = vand.u32 2147483647, %v743
    %vm769 = vcmp.eq.f32.partialorder %v768, 8.507059e+37
    %v770 = vand.u32 %v743, 2147483648
    %v771 = vor.u32 1.1754944e-38, %v770
    %v772 = vsel %vm769, %v771, %v767
    %v773 = vmul.f32 1.0, %v772
    %v774 = vtanh.pop %v735
    %v775 = vmul.f32 %v758, %v695
    %777 = vrot.lane.b32.xlu0 %v774, 64
    %v778 = vpop.permute.xlu0 %777
    %v780 = vmul.f32 %v758, %v778
    %782 = vrot.lane.b32.xlu0 %v780, 64
    %v783 = vpop.permute.xlu0 %782
    %v785 = vadd.f32 %v775, %v783
    %v786 = vtanh.pop %v785
    %788 = vrot.lane.b32.xlu0 %v786, 64
    %v789 = vpop.permute.xlu0 %788
    %v791 = vmul.f32 %v773, %v789
    %v792 = vld [vmem:[#allocation2 + $0x60] sm:$0xff]
    %v793 = vld [vmem:[#allocation2 + $0x68] sm:$0xff]
    %v794 = vpack.c.bf16 %v791, %v791
    %v796 = vsel %vm254, %v794, 0
    %798 = vmatpush.bf16.msra.mxu0 0
    %799 = vmatpush.bf16.msra.mxu0 0
    %800 = vmatpush.bf16.msra.mxu0 0
    %801 = vmatpush.bf16.msra.mxu0 0
    %802 = vmatpush.bf16.msra.mxu0 %v244
    %803 = vmatpush.bf16.msra.mxu0 %v242
    %804 = vmatpush.bf16.msra.mxu0 %v240
    %805 = vmatpush.bf16.msra.mxu0 %v238
    %806 = vmatmul.bf16.gmra.mxu0 %v796
    %v807 = vpop.f32.mrf.mxu0
    %v808 = vadd.f32 0.0, %v807
    %v809 = vpop.f32.mrf.mxu0
    %810 = vdwg.mxu0
    %811 = vmatpush.bf16.msra.mxu0 0
    %812 = vmatpush.bf16.msra.mxu0 0
    %813 = vmatpush.bf16.msra.mxu0 0
    %814 = vmatpush.bf16.msra.mxu0 0
    %815 = vmatpush.bf16.msra.mxu0 %v245
    %816 = vmatpush.bf16.msra.mxu0 %v243
    %817 = vmatpush.bf16.msra.mxu0 %v241
    %818 = vmatpush.bf16.msra.mxu0 %v239
    %819 = vmatmul.bf16.gmra.mxu0 %v796
    %v820 = vpop.f32.mrf.mxu0
    %v821 = vadd.f32 0.0, %v820
    %v822 = vpop.f32.mrf.mxu0
    %823 = vdwg.mxu0
    %v824 = vadd.f32 %v792, %v808
    %v825 = vadd.f32 %v793, %v821
    %v826 = vxor.u32 %v824, 2147483648
    %v827 = vxor.u32 %v825, 2147483648
    %v828 = vmul.f32 %v826, 1.442695
    %v829 = vpow.pop %v828
    %v830 = vmul.f32 %v827, 1.442695
    %v831 = vpow.pop %v830
    %v832 = vadd.f32 %v829, 1.0
    %v833 = vadd.f32 %v831, 1.0
    %v834 = vrcp.pop %v832
    %v835 = vmul.f32 %v832, %v834
    %v836 = vsub.f32 1.0, %v835
    %v837 = vmul.f32 %v834, %v836
    %v838 = vadd.f32 %v834, %v837
    %vm839 = vweird.f32 %v832
    %vm840 = vweird.f32 %v834
    %vm841 = vmor %vm839, %vm840
    %v842 = vsel %vm841, %v834, %v838
    %v843 = vand.u32 2147483647, %v832
    %vm844 = vcmp.eq.f32.partialorder %v843, 8.507059e+37
    %v845 = vand.u32 %v832, 2147483648
    %v846 = vor.u32 1.1754944e-38, %v845
    %v847 = vsel %vm844, %v846, %v842
    %v848 = vmul.f32 1.0, %v847
    %v849 = vrcp.pop %v833
    %v850 = vmul.f32 %v833, %v849
    %v851 = vsub.f32 1.0, %v850
    %v852 = vmul.f32 %v849, %v851
    %v853 = vadd.f32 %v849, %v852
    %vm854 = vweird.f32 %v833
    %vm855 = vweird.f32 %v849
    %vm856 = vmor %vm854, %vm855
    %v857 = vsel %vm856, %v849, %v853
    %v858 = vand.u32 2147483647, %v833
    %vm859 = vcmp.eq.f32.partialorder %v858, 8.507059e+37
    %v860 = vand.u32 %v833, 2147483648
    %v861 = vor.u32 1.1754944e-38, %v860
    %v862 = vsel %vm859, %v861, %v857
    %v863 = vmul.f32 1.0, %v862
    %v864 = vtanh.pop %v825
    %v865 = vmul.f32 %v848, %v785
    %867 = vrot.lane.b32.xlu0 %v864, 64
    %v868 = vpop.permute.xlu0 %867
    %v870 = vmul.f32 %v848, %v868
    %872 = vrot.lane.b32.xlu0 %v870, 64
    %v873 = vpop.permute.xlu0 %872
    %v875 = vadd.f32 %v865, %v873
    %v876 = vtanh.pop %v875
    %878 = vrot.lane.b32.xlu0 %v876, 64
    %v879 = vpop.permute.xlu0 %878
    %v881 = vmul.f32 %v863, %v879
    %v882 = vld [vmem:[#allocation2 + $0x70] sm:$0xff]
    %v883 = vld [vmem:[#allocation2 + $0x78] sm:$0xff]
    %v884 = vpack.c.bf16 %v881, %v881
    %v886 = vsel %vm254, %v884, 0
    %888 = vmatpush.bf16.msra.mxu0 0
    %889 = vmatpush.bf16.msra.mxu0 0
    %890 = vmatpush.bf16.msra.mxu0 0
    %891 = vmatpush.bf16.msra.mxu0 0
    %892 = vmatpush.bf16.msra.mxu0 %v244
    %893 = vmatpush.bf16.msra.mxu0 %v242
    %894 = vmatpush.bf16.msra.mxu0 %v240
    %895 = vmatpush.bf16.msra.mxu0 %v238
    %896 = vmatmul.bf16.gmra.mxu0 %v886
    %v897 = vpop.f32.mrf.mxu0
    %v898 = vadd.f32 0.0, %v897
    %v899 = vpop.f32.mrf.mxu0
    %900 = vdwg.mxu0
    %901 = vmatpush.bf16.msra.mxu0 0
    %902 = vmatpush.bf16.msra.mxu0 0
    %903 = vmatpush.bf16.msra.mxu0 0
    %904 = vmatpush.bf16.msra.mxu0 0
    %905 = vmatpush.bf16.msra.mxu0 %v245
    %906 = vmatpush.bf16.msra.mxu0 %v243
    %907 = vmatpush.bf16.msra.mxu0 %v241
    %908 = vmatpush.bf16.msra.mxu0 %v239
    %909 = vmatmul.bf16.gmra.mxu0 %v886
    %v910 = vpop.f32.mrf.mxu0
    %v911 = vadd.f32 0.0, %v910
    %v912 = vpop.f32.mrf.mxu0
    %913 = vdwg.mxu0
    %v914 = vadd.f32 %v882, %v898
    %v915 = vadd.f32 %v883, %v911
    %v916 = vxor.u32 %v914, 2147483648
    %v917 = vxor.u32 %v915, 2147483648
    %v918 = vmul.f32 %v916, 1.442695
    %v919 = vpow.pop %v918
    %v920 = vmul.f32 %v917, 1.442695
    %v921 = vpow.pop %v920
    %v922 = vadd.f32 %v919, 1.0
    %v923 = vadd.f32 %v921, 1.0
    %v924 = vrcp.pop %v922
    %v925 = vmul.f32 %v922, %v924
    %v926 = vsub.f32 1.0, %v925
    %v927 = vmul.f32 %v924, %v926
    %v928 = vadd.f32 %v924, %v927
    %vm929 = vweird.f32 %v922
    %vm930 = vweird.f32 %v924
    %vm931 = vmor %vm929, %vm930
    %v932 = vsel %vm931, %v924, %v928
    %v933 = vand.u32 2147483647, %v922
    %vm934 = vcmp.eq.f32.partialorder %v933, 8.507059e+37
    %v935 = vand.u32 %v922, 2147483648
    %v936 = vor.u32 1.1754944e-38, %v935
    %v937 = vsel %vm934, %v936, %v932
    %v938 = vmul.f32 1.0, %v937
    %v939 = vrcp.pop %v923
    %v940 = vmul.f32 %v923, %v939
    %v941 = vsub.f32 1.0, %v940
    %v942 = vmul.f32 %v939, %v941
    %v943 = vadd.f32 %v939, %v942
    %vm944 = vweird.f32 %v923
    %vm945 = vweird.f32 %v939
    %vm946 = vmor %vm944, %vm945
    %v947 = vsel %vm946, %v939, %v943
    %v948 = vand.u32 2147483647, %v923
    %vm949 = vcmp.eq.f32.partialorder %v948, 8.507059e+37
    %v950 = vand.u32 %v923, 2147483648
    %v951 = vor.u32 1.1754944e-38, %v950
    %v952 = vsel %vm949, %v951, %v947
    %v953 = vmul.f32 1.0, %v952
    %v954 = vtanh.pop %v915
    %v955 = vmul.f32 %v938, %v875
    %957 = vrot.lane.b32.xlu0 %v954, 64
    %v958 = vpop.permute.xlu0 %957
    %v960 = vmul.f32 %v938, %v958
    %962 = vrot.lane.b32.xlu0 %v960, 64
    %v963 = vpop.permute.xlu0 %962
    %v965 = vadd.f32 %v955, %v963
    %v966 = vtanh.pop %v965
    %968 = vrot.lane.b32.xlu0 %v966, 64
    %v969 = vpop.permute.xlu0 %968
    %v971 = vmul.f32 %v953, %v969
    %v972 = vld [vmem:[%s4] sm:$0xff]
    %v973 = vld [vmem:[%s4 + $0x8] sm:$0xff]
    %v974 = vld [vmem:[%s4 + $0x10] sm:$0xff]
    %v975 = vld [vmem:[%s4 + $0x18] sm:$0xff]
    %v976 = vld [vmem:[%s4 + $0x20] sm:$0xff]
    %v977 = vld [vmem:[%s4 + $0x28] sm:$0xff]
    %v978 = vld [vmem:[%s4 + $0x30] sm:$0xff]
    %v979 = vld [vmem:[%s4 + $0x38] sm:$0xff]
    %v980 = vld [vmem:[%s5] sm:$0x1]
    %v982 = vperm.slane %v980, 0
    %v985 = vsel %vm254, %v971, 0
    %987 = vmatpush.msra.mxu0 0.0
    %988 = vmatpush.msra.mxu0 0.0
    %989 = vmatpush.msra.mxu0 0.0
    %990 = vmatpush.msra.mxu0 0.0
    %991 = vmatpush.msra.mxu0 0.0
    %992 = vmatpush.msra.mxu0 0.0
    %993 = vmatpush.msra.mxu0 0.0
    %994 = vmatpush.msra.mxu0 0.0
    %995 = vmatpush.msra.mxu0 %v979
    %996 = vmatpush.msra.mxu0 %v978
    %997 = vmatpush.msra.mxu0 %v977
    %998 = vmatpush.msra.mxu0 %v976
    %999 = vmatpush.msra.mxu0 %v975
    %1000 = vmatpush.msra.mxu0 %v974
    %1001 = vmatpush.msra.mxu0 %v973
    %1002 = vmatpush.msra.mxu0 %v972
    %1003 = vmatmul.f32.gmra.mxu0 %v985
    %v1004 = vpop.f32.mrf.mxu0
    %v1005 = vadd.f32 %v982, %v1004
    %1006 = vdwg.mxu0
    %1007 = vst [vmem:[%s6] sm:$0xff] %v1005
    // Predicated region
    $region34: #{rnn_forward.1} parent=1 // pred_check
      _
    $region35: #{rnn_forward.1} parent=1 // pred_check_branch
      %1009 = sbr.rel (0) target = $region37
    $region36: #{rnn_forward.1} parent=1 // pred_region
      _
    $region37: #{rnn_forward.1} parent=1 // pred_fallthru
      _
    // Predicated region
    $region38: #{rnn_forward.1} parent=1 // pred_check
      _
    $region39: #{rnn_forward.1} parent=1 // pred_check_branch
      %1011 = sbr.rel (0) target = $region41
    $region40: #{rnn_forward.1} parent=1 // pred_region
      _
    $region41: #{rnn_forward.1} parent=1 // pred_fallthru
      _
    %1012 = vsyncpa [#allocation4], 1
    %1013 = vsyncpa [#allocation6], 1

</llo_original>
